<compile_context>
chip_gen: v7x
topology: tpu7x:2x2x1
jax: 0.10.0
libtpu: 0.0.40
codegen_flags: <defaults>
</compile_context>

<pallas_src>
import jax
import jax.numpy as jnp
from jax.experimental import pallas as pl
from jax.experimental.pallas import tpu as pltpu

_LANES = 128
_COL_CANDIDATES = (2048, 1024, 512, 256, 128)
_TARGET_BLOCK_BYTES = 8 * 1024 * 1024   # per-buffer block cap (amortizes grid-step overhead)
_VMEM_LIMIT_BYTES = 40 * 1024 * 1024    # covers 2 in + 2 out double-buffers at 8 MiB each
_MEGACORE_MIN_BYTES = 2 * 1024 * 1024   # above this, force >= 2 grid blocks (v7x 2 TCs)
_DEFAULT_MIN_PALLAS_SIZE = 32768        # below this, plain XLA elementwise is faster


def _swish_kernel(x_ref, o_ref):
    x = x_ref[...]
    if x.dtype == jnp.float32 or x.dtype == jnp.bfloat16:
        # Native-dtype compute: bf16 VPU/EUP on v6e/v7x; Mosaic handles v5e.
        o_ref[...] = x * jax.nn.sigmoid(x)
    else:
        xf = x.astype(jnp.float32)
        o_ref[...] = (xf * jax.nn.sigmoid(xf)).astype(o_ref.dtype)


def _pick_cols(total: int, last_dim: int):
    """Choose a lane-dense column count. Returns (cols, needs_pad)."""
    best = 0
    # Reuse the original last dim when it is already a 128-multiple (it always
    # divides `total`), unless a wider standard candidate also divides cleanly.
    if 0 < last_dim <= 4096 and last_dim % _LANES == 0:
        best = last_dim
    for c in _COL_CANDIDATES:  # descending; first hit is the widest
        if c > best and total % c == 0:
            best = c
            break
    if best:
        return best, False
    # Rare ragged fallback: pad only the tail of the final row.
    return (1024 if total >= 8 * _LANES * 8 else _LANES), True


def _pick_tile_rows(rows: int, cols: int, itemsize: int) -> int:
    """Row-tile size: sublane-multiple, ~8 MiB cap, >=2 blocks when sizeable."""
    sub = max(8, 32 // itemsize)           # 8 f32, 16 bf16/f16, 32 int8/fp8
    if rows <= sub:
        return rows                        # block row dim == full dim: always legal
    target = max(sub, _TARGET_BLOCK_BYTES // (cols * itemsize))
    if rows * cols * itemsize > _MEGACORE_MIN_BYTES:
        # Guarantee at least two grid steps so both v7x TensorCores get work.
        target = min(target, max(sub, rows // 2))
    tile = min(target, rows)
    return max(sub, (tile // sub) * sub)   # round down to the packing multiple


def swish(x: jax.Array, *, min_pallas_size: int = _DEFAULT_MIN_PALLAS_SIZE,
          donate: bool = False) -> jax.Array:
    """Elementwise x * sigmoid(x), matching torch `x.mul_(torch.sigmoid(x))`.

    JAX is functional, so this returns a new array instead of mutating the
    input; pass donate=True (and donate the buffer at the jit boundary) to let
    XLA reuse the input allocation for the output.
    """
    orig_shape = x.shape
    orig_dtype = x.dtype
    total = x.size
    if total == 0:
        return x
    if total < min_pallas_size:
        # Tiny tensors: fused XLA elementwise beats kernel-launch overhead.
        return (x * jax.nn.sigmoid(x)).astype(orig_dtype)

    itemsize = jnp.dtype(orig_dtype).itemsize
    last_dim = orig_shape[-1] if orig_shape else 1
    cols, needs_pad = _pick_cols(total, last_dim)

    flat = x.reshape(-1)
    if needs_pad:
        rows = pl.cdiv(total, cols)
        pad = rows * cols - total
        if pad:
            flat = jnp.pad(flat, (0, pad))  # rare ragged path; swish(0) == 0
    else:
        rows = total // cols

    x2 = flat.reshape(rows, cols)
    tile_r = _pick_tile_rows(rows, cols, itemsize)
    grid = (pl.cdiv(rows, tile_r),)         # Pallas handles a partial last block

    out2 = pl.pallas_call(
        _swish_kernel,
        out_shape=jax.ShapeDtypeStruct((rows, cols), orig_dtype),
        grid=grid,
        in_specs=[pl.BlockSpec((tile_r, cols), lambda i: (i, 0))],
        out_specs=pl.BlockSpec((tile_r, cols), lambda i: (i, 0)),
        input_output_aliases=({0: 0} if donate else {}),
        compiler_params=pltpu.CompilerParams(
            dimension_semantics=("parallel",),
            vmem_limit_bytes=_VMEM_LIMIT_BYTES,
        ),
    )(x2)

    if needs_pad:
        return out2.reshape(-1)[:total].reshape(orig_shape)
    return out2.reshape(orig_shape)


if __name__ == "__main__":
    k0, k1, k2 = jax.random.split(jax.random.PRNGKey(0), 3)

    # 1) Small NCHW input like the PyTorch module receives (batch=2, ch=4, 16x16).
    #    Force the Pallas path (bypass the small-input early exit) so the kernel runs.
    x = jax.random.normal(k0, (2, 4, 16, 16), dtype=jnp.float32)
    y = jax.block_until_ready(swish(x, min_pallas_size=0))
    ref = x * jax.nn.sigmoid(x)
    assert y.shape == x.shape and y.dtype == x.dtype
    assert jnp.allclose(y, ref, atol=1e-6, rtol=1e-6)

    # 2) bf16 input: exercises the native-bf16 compute path and the no-pad fast path.
    xb = jax.random.normal(k1, (4, 8, 32, 64), dtype=jnp.bfloat16)
    yb = jax.block_until_ready(swish(xb))
    refb = xb.astype(jnp.float32) * jax.nn.sigmoid(xb.astype(jnp.float32))
    assert yb.shape == xb.shape and yb.dtype == xb.dtype
    assert jnp.allclose(yb.astype(jnp.float32), refb, atol=2e-2, rtol=2e-2)

    # 3) Ragged element count: exercises the (rare) pad fallback path.
    xr = jax.random.normal(k2, (2, 3, 17, 19), dtype=jnp.float32)
    yr = jax.block_until_ready(swish(xr, min_pallas_size=0))
    refr = xr * jax.nn.sigmoid(xr)
    assert yr.shape == xr.shape and yr.dtype == xr.dtype
    assert jnp.allclose(yr, refr, atol=1e-6, rtol=1e-6)

    print("KERNEL_OK")
</pallas_src>

<mosaic_0001>
module attributes {stable_mosaic.version = 11 : i64} {
  func.func @_swish_kernel(%arg0: i32, %arg1: memref<1x2048xf32, #tpu.memory_space<vmem>>, %arg2: memref<1x2048xf32, #tpu.memory_space<vmem>>) attributes {dimension_semantics = [#tpu.dimension_semantics<parallel>], iteration_bounds = array<i64: 1>, scalar_prefetch = 0 : i64, scratch_operands = 0 : i64, tpu.core_type = #tpu.core_type<tc>, window_params = [{transform_indices = @transform_0, window_bounds = array<i64: 1, 2048>}, {transform_indices = @transform_1, window_bounds = array<i64: 1, 2048>}]} {
    %c0 = arith.constant 0 : index
    %c0_0 = arith.constant 0 : index
    %0 = vector.load %arg1[%c0, %c0_0] : memref<1x2048xf32, #tpu.memory_space<vmem>>, vector<1x2048xf32>
    %1 = arith.negf %0 : vector<1x2048xf32>
    %2 = math.exp %1 : vector<1x2048xf32>
    %cst = arith.constant 1.000000e+00 : f32
    %3 = vector.broadcast %cst : f32 to vector<1x2048xf32>
    %4 = arith.addf %3, %2 : vector<1x2048xf32>
    %5 = arith.divf %3, %4 : vector<1x2048xf32>
    %6 = arith.mulf %0, %5 : vector<1x2048xf32>
    %c0_1 = arith.constant 0 : index
    %c0_2 = arith.constant 0 : index
    %7 = vector.load %arg2[%c0_1, %c0_2] : memref<1x2048xf32, #tpu.memory_space<vmem>>, vector<1x2048xf32>
    tpu.vector_store %arg2[%c0_1, %c0_2], %6 {strides = array<i32>} : memref<1x2048xf32, #tpu.memory_space<vmem>>, vector<1x2048xf32>,
    return
  }
  func.func @transform_0(%arg0: i32) -> (i32, i32) {
    %c0_i32 = arith.constant 0 : i32
    %c0_i32_0 = arith.constant 0 : i32
    return %arg0, %c0_i32 : i32, i32
  }
  func.func @transform_1(%arg0: i32) -> (i32, i32) {
    %c0_i32 = arith.constant 0 : i32
    %c0_i32_0 = arith.constant 0 : i32
    return %arg0, %c0_i32 : i32, i32
  }
}

</mosaic_0001>

<llo_original>
// kernel: tpu_custom_call.1
$region0: #{tpu_custom_call.1}
  #allocation0 [shape = 'u32[]', space=smem, size = 0x4, offset = 0x4, fixed_abs, tag = 'smem constant byte address 0x4 - core index']
  #allocation1 [shape = 'u32[144,128]{1,0:T(1,128)}', space=vmem, size = 0x12000, scoped, tag = 'internal scratch']
  %s0 = inlined_call_operand.hbm [shape: f32[1,2048], index: 0, kind: input, shape index: {}]
  %s1 = inlined_call_operand.hbm [shape: f32[1,2048], index: 1, kind: output, shape index: {}]
  %s2 = sld [smem:[#allocation0]]
  $region18: #{tpu_custom_call.1} parent=0
    _
  %s4 = ssub.s32 1, %s2
  %s5 = scalar_select 0, %s4, %s2
  $region1: #{tpu_custom_call.1} parent=0
    #allocation2 [shape = 'u8[8192]{0}', space=vmem, size = 0x2000, scoped, tag = 'input window, operand 0, single buffered']
    #allocation3 [shape = 's32[1]{0}', space=sflag, size = 0x4, scoped, tag = 'scoped memory for tpu_custom_call.1']
    #allocation4 [shape = 's32[1]{0}', space=sflag, size = 0x4, scoped, tag = 'scoped memory for tpu_custom_call.1']
    #allocation5 [shape = 'u8[8192]{0}', space=vmem, size = 0x2000, scoped, tag = 'output window, operand 0, single buffered']
    %6 = vsyncpa [#allocation3], 0
    %7 = vsyncpa [#allocation4], 0
    // Predicated region
    $region2: #{tpu_custom_call.1} parent=1 // pred_check
      _
    $region3: #{tpu_custom_call.1} parent=1 // pred_check_branch
      %9 = sbr.rel (0) target = $region5
    $region4: #{tpu_custom_call.1} parent=1 // pred_region
      %s11 = ssub.s32 256, 256
      %12 = vsyncadd [#allocation3], %s11
      %s14 = sshll.u32 [#allocation2], 4
      %s15 = int_to_ptr.vmem [resolvable:$true] %s14
      %17 = dma.hbm_to_vmem [thread:$0]  %s0, 256, %s15, [#allocation3]
    $region5: #{tpu_custom_call.1} parent=1 // pred_fallthru
      _
    // Predicated region
    $region6: #{tpu_custom_call.1} parent=1 // pred_check
      _
    $region7: #{tpu_custom_call.1} parent=1 // pred_check_branch
      %19 = sbr.rel (0) target = $region9
    $region8: #{tpu_custom_call.1} parent=1 // pred_region
      %20 = dma.done [#allocation3], 256
    $region9: #{tpu_custom_call.1} parent=1 // pred_fallthru
      _
    %v21 = vld [vmem:[#allocation2] sm:$0xff]
    %v22 = vld [vmem:[#allocation2 + $0x8] sm:$0xff]
    %v23 = vxor.u32 %v21, 2147483648
    %v24 = vxor.u32 %v22, 2147483648
    %v25 = vmul.f32 %v23, 1.442695
    %v26 = vpow.pop %v25
    %v27 = vmul.f32 %v24, 1.442695
    %v28 = vpow.pop %v27
    %v29 = vadd.f32 %v26, 1.0
    %v30 = vadd.f32 %v28, 1.0
    %v31 = vrcp.pop %v29
    %v32 = vmul.f32 1.0, %v31
    %v33 = vrcp.pop %v30
    %v34 = vmul.f32 1.0, %v33
    %v35 = vmul.f32 %v21, %v32
    %v36 = vmul.f32 %v22, %v34
    %37 = vst [vmem:[#allocation5] sm:$0xff] %v35
    %38 = vst [vmem:[#allocation5 + $0x8] sm:$0xff] %v36
    // Predicated region
    $region10: #{tpu_custom_call.1} parent=1 // pred_check
      _
    $region11: #{tpu_custom_call.1} parent=1 // pred_check_branch
      %40 = sbr.rel (0) target = $region13
    $region12: #{tpu_custom_call.1} parent=1 // pred_region
      %s42 = ssub.s32 256, 256
      %43 = vsyncadd [#allocation4], %s42
      %s45 = sshll.u32 [#allocation5], 4
      %s46 = int_to_ptr.vmem [resolvable:$true] %s45
      %48 = dma.vmem_to_hbm [thread:$0]  %s46, 256, %s1, [#allocation4]
    $region13: #{tpu_custom_call.1} parent=1 // pred_fallthru
      _
    // Predicated region
    $region14: #{tpu_custom_call.1} parent=1 // pred_check
      _
    $region15: #{tpu_custom_call.1} parent=1 // pred_check_branch
      %50 = sbr.rel (0) target = $region17
    $region16: #{tpu_custom_call.1} parent=1 // pred_region
      %51 = dma.done [#allocation4], 256
    $region17: #{tpu_custom_call.1} parent=1 // pred_fallthru
      _
    %52 = vsyncpa [#allocation3], 1
    %53 = vsyncpa [#allocation4], 1

</llo_original>
